<compile_context>
chip_gen: v7x
topology: tpu7x:2x2x1
jax: 0.10.0
libtpu: 0.0.40
codegen_flags: <defaults>
</compile_context>

<pallas_src>
import jax
import jax.numpy as jnp
from jax import lax
from jax.experimental import pallas as pl
from jax.experimental.pallas import tpu as pltpu


def _fullpro_kernel(nrow_ref, ncol_ref, s_ref, out_ref):
    """Grid = (batch tiles, row tiles).  Block = (TB, TN, M).

    nrow_ref / ncol_ref : SMEM int32[B]   (scalar-prefetched)
    s_ref / out_ref     : VMEM <input dtype>[TB, TN, M]
    """
    TB, TN, M = s_ref.shape
    bi = pl.program_id(0)
    row0 = pl.program_id(1) * TN

    row_idx = row0 + lax.broadcasted_iota(jnp.int32, (TN, 1), 0)   # global row ids (TN, 1)
    col_idx = lax.broadcasted_iota(jnp.int32, (1, M), 1)           # column ids     (1, M)
    neg_big = jnp.float32(-1e30)

    def slab(t):
        b = bi * TB + t
        nrow = nrow_ref[b]
        ncol = ncol_ref[b]

        x = s_ref[t].astype(jnp.float32)                           # (TN, M) f32

        # L2-normalization scale over the FULL row (matches F.normalize, eps=1e-12):
        #   r = 1 / max(||x||, eps) = rsqrt(max(sum(x^2), eps^2))   -> EUP
        sq = jnp.sum(x * x, axis=-1, keepdims=True)
        r = lax.rsqrt(jnp.maximum(sq, jnp.float32(1e-24)))          # (TN, 1) > 0

        # softmax(x * r) over the valid column range; r > 0 so the row max commutes
        # with the scale and xn = x * r never needs to be materialized.
        col_valid = col_idx < ncol                                  # (1, M)
        valid = (row_idx < nrow) & col_valid                        # (TN, M)
        masked = jnp.where(col_valid, x, neg_big)
        m = jnp.max(masked, axis=-1, keepdims=True)
        # Select on e (before the sum) gives exact zeros for invalid rows/cols and
        # keeps NaN/garbage from padded out-of-bounds row blocks out of the denominator.
        e = jnp.where(valid, jnp.exp((masked - m) * r), 0.0)
        # Clamp has no PyTorch counterpart; it only fires for fully-masked rows,
        # which are already all-zero in e.
        denom = jnp.maximum(jnp.sum(e, axis=-1, keepdims=True), jnp.float32(1e-6))
        out_ref[t] = (e * pl.reciprocal(denom, approx=True)).astype(out_ref.dtype)

    if TB == 1:
        slab(0)
    else:
        def body(t, carry):
            slab(t)
            return carry
        lax.fori_loop(0, TB, body, 0)


def _choose_tiles(B, N, M, dtype):
    """Pick (TB packed batch elements, TN rows) for ~2 MiB blocks in the input dtype.

    Also forces the grid to have >= 2 steps along a parallel axis when possible
    (so both v7x TensorCores get work).
    """
    itemsize = jnp.dtype(dtype).itemsize
    sub = max(8, 32 // itemsize)            # sublane multiple: f32->8, bf16->16, int8->32
    target = 2 << 20                        # ~2 MiB per block copy (fits v5e..v7x budgets)

    # Rows per tile: multiple of `sub`, or the full dim.
    row_bytes = max(1, M * itemsize)
    max_rows = max(1, target // row_bytes)
    if N <= max_rows:
        tn = N
    else:
        tn = max(sub, (max_rows // sub) * sub)
    tn = min(tn, N)                         # full-dim block if rounding overshot

    # Pack batch elements only when a whole (N, M) slab is small; TB must divide B.
    # Cap at 8: the in-kernel fori_loop keeps only one slab live at a time anyway.
    tb = 1
    if tn == N:
        slab_bytes = max(1, N * M * itemsize)
        cap = max(1, min(B, 8, target // slab_bytes))
        for d in range(cap, 0, -1):
            if B % d == 0:
                tb = d
                break

    # v7x megacore: prefer >= 2 grid steps along a parallel axis.
    def grid_steps(tb_, tn_):
        return (B // tb_) * (-(-N // tn_))

    while grid_steps(tb, tn) < 2:
        if tb > 1:
            tb2 = tb - 1
            while tb2 > 1 and B % tb2 != 0:
                tb2 -= 1
            tb = max(1, tb2)
        elif tn > sub:
            tn = max(sub, ((tn // 2) // sub) * sub)
        else:
            break                           # nothing left to split
    return tb, tn


@jax.jit
def _fullpro_pallas(s, nrow_gt, ncol_gt):
    B, N, M = s.shape
    tb, tn = _choose_tiles(B, N, M, s.dtype)
    grid = (B // tb, pl.cdiv(N, tn))

    # VMEM budget: 2x double-buffered input block + 2x output block + ~6 f32 (TN, M)
    # temporaries (one slab live at a time inside the fori_loop) + headroom.
    itemsize = jnp.dtype(s.dtype).itemsize
    block_bytes = tb * tn * M * itemsize
    slab_f32_bytes = tn * M * 4
    vmem_limit = int(min(max(4 * block_bytes + 6 * slab_f32_bytes + (2 << 20),
                             16 << 20),
                         48 << 20))

    grid_spec = pltpu.PrefetchScalarGridSpec(
        num_scalar_prefetch=2,
        grid=grid,
        in_specs=[pl.BlockSpec((tb, tn, M), lambda bi, ri, nr, nc: (bi, ri, 0))],
        out_specs=pl.BlockSpec((tb, tn, M), lambda bi, ri, nr, nc: (bi, ri, 0)),
    )
    return pl.pallas_call(
        _fullpro_kernel,
        out_shape=jax.ShapeDtypeStruct((B, N, M), s.dtype),
        grid_spec=grid_spec,
        compiler_params=pltpu.CompilerParams(
            dimension_semantics=("parallel", "parallel"),
            vmem_limit_bytes=vmem_limit),
    )(nrow_gt, ncol_gt, s)


def fullpro(s, nrow_gt, ncol_gt=None):
    """Wrapper matching the PyTorch forward signature. Output keeps the input dtype."""
    s = jnp.asarray(s)
    B, N, M = s.shape
    nrow_gt = jnp.asarray(nrow_gt, jnp.int32)
    if ncol_gt is None:
        ncol_gt = jnp.full((B,), M, jnp.int32)    # full rows valid
    else:
        ncol_gt = jnp.asarray(ncol_gt, jnp.int32)
    return _fullpro_pallas(s, nrow_gt, ncol_gt)


def _reference(s, nrow_gt, ncol_gt=None):
    """Pure-JAX reference mirroring the PyTorch loop."""
    B, N, M = s.shape
    norm = jnp.maximum(jnp.linalg.norm(s, axis=-1, keepdims=True), 1e-12)
    norm_s = s / norm
    out = jnp.zeros_like(s)
    for b in range(B):
        n = int(nrow_gt[b])
        c = M if ncol_gt is None else int(ncol_gt[b])
        if n > 0 and c > 0:
            out = out.at[b, :n, :c].set(jax.nn.softmax(norm_s[b, :n, :c], axis=-1))
    return out


if __name__ == "__main__":
    key = jax.random.PRNGKey(0)
    k1, k2 = jax.random.split(key)

    # Case 1 / 2: small f32, M not lane-aligned (masked-store path), with / without ncol_gt.
    B, N, M = 2, 8, 16
    s = jax.random.normal(k1, (B, N, M), dtype=jnp.float32)
    nrow_gt = jnp.array([6, 3], dtype=jnp.int32)
    ncol_gt = jnp.array([10, 16], dtype=jnp.int32)

    out1 = jax.block_until_ready(fullpro(s, nrow_gt, ncol_gt))
    ref1 = _reference(s, nrow_gt, ncol_gt)
    assert out1.dtype == s.dtype
    assert jnp.allclose(out1, ref1, atol=2e-3, rtol=2e-3), "mismatch (ncol_gt given)"

    out2 = jax.block_until_ready(fullpro(s, nrow_gt, None))
    ref2 = _reference(s, nrow_gt, None)
    assert jnp.allclose(out2, ref2, atol=2e-3, rtol=2e-3), "mismatch (ncol_gt=None)"

    # Case 3: bf16 I/O (kernel upcasts to f32 internally, stores bf16).
    s_bf = jax.random.normal(k2, (3, 8, 16), dtype=jnp.float32).astype(jnp.bfloat16)
    nrow_bf = jnp.array([8, 2, 5], dtype=jnp.int32)
    ncol_bf = jnp.array([16, 7, 12], dtype=jnp.int32)
    out3 = jax.block_until_ready(fullpro(s_bf, nrow_bf, ncol_bf))
    ref3 = _reference(s_bf.astype(jnp.float32), nrow_bf, ncol_bf)
    assert out3.dtype == jnp.bfloat16
    assert jnp.allclose(out3.astype(jnp.float32), ref3, atol=2e-2, rtol=2e-2), "mismatch (bf16)"

    # Case 4: M >= 128 and not a multiple of 128 (masked tail store, no host padding);
    # also exercises the ncol_gt == 0 (empty softmax slice) edge case.
    B4, N4, M4 = 2, 16, 144
    s4 = jax.random.normal(jax.random.PRNGKey(3), (B4, N4, M4), dtype=jnp.float32)
    nrow4 = jnp.array([12, 16], dtype=jnp.int32)
    ncol4 = jnp.array([144, 0], dtype=jnp.int32)
    out4 = jax.block_until_ready(fullpro(s4, nrow4, ncol4))
    ref4 = _reference(s4, nrow4, ncol4)
    assert jnp.allclose(out4, ref4, atol=2e-3, rtol=2e-3), "mismatch (unpadded M / ncol=0)"

    print("KERNEL_OK")
</pallas_src>

<mosaic_0001>
module attributes {stable_mosaic.version = 11 : i64} {
  func.func @_fullpro_kernel(%arg0: i32, %arg1: i32, %arg2: memref<2xi32, #tpu.memory_space<smem>>, %arg3: memref<2xi32, #tpu.memory_space<smem>>, %arg4: memref<1x8x16xf32, #tpu.memory_space<vmem>>, %arg5: memref<1x8x16xf32, #tpu.memory_space<vmem>>) attributes {dimension_semantics = [#tpu.dimension_semantics<parallel>, #tpu.dimension_semantics<parallel>], iteration_bounds = array<i64: 2, 1>, scalar_prefetch = 2 : i64, scratch_operands = 0 : i64, tpu.core_type = #tpu.core_type<tc>, window_params = [{transform_indices = @transform_0, window_bounds = array<i64: 1, 8, 16>}, {transform_indices = @transform_1, window_bounds = array<i64: 1, 8, 16>}]} {
    %c8_i32 = arith.constant 8 : i32
    %0 = arith.muli %arg1, %c8_i32 : i32
    %1 = tpu.iota {dimensions = array<i32: 0>} : vector<8x1xi32>
    %2 = vector.broadcast %0 : i32 to vector<8x1xi32>
    %3 = arith.addi %2, %1 : vector<8x1xi32>
    %4 = tpu.iota {dimensions = array<i32: 1>} : vector<1x16xi32>
    %c1_i32 = arith.constant 1 : i32
    %5 = arith.muli %arg0, %c1_i32 : i32
    %c0_i32 = arith.constant 0 : i32
    %6 = arith.addi %5, %c0_i32 : i32
    %7 = arith.index_cast %6 : i32 to index
    %8 = memref.load %arg2[%7] : memref<2xi32, #tpu.memory_space<smem>>
    %9 = arith.index_cast %6 : i32 to index
    %10 = memref.load %arg3[%9] : memref<2xi32, #tpu.memory_space<smem>>
    %c0 = arith.constant 0 : index
    %c0_0 = arith.constant 0 : index
    %c0_1 = arith.constant 0 : index
    %11 = vector.load %arg4[%c0, %c0_0, %c0_1] : memref<1x8x16xf32, #tpu.memory_space<vmem>>, vector<1x8x16xf32>
    %12 = vector.shape_cast %11 : vector<1x8x16xf32> to vector<8x16xf32>
    %13 = arith.mulf %12, %12 : vector<8x16xf32>
    %cst = arith.constant dense<0.000000e+00> : vector<8xf32>
    %14 = vector.multi_reduction <add>, %13, %cst [1] : vector<8x16xf32> to vector<8xf32>
    %15 = vector.shape_cast %14 : vector<8xf32> to vector<8x1xf32>
    %cst_2 = arith.constant 1.000000e-24 : f32
    %16 = vector.broadcast %cst_2 : f32 to vector<8x1xf32>
    %17 = arith.maximumf %15, %16 : vector<8x1xf32>
    %18 = math.rsqrt %17 : vector<8x1xf32>
    %19 = vector.broadcast %10 : i32 to vector<1x16xi32>
    %20 = arith.cmpi slt, %4, %19 : vector<1x16xi32>
    %21 = vector.broadcast %8 : i32 to vector<8x1xi32>
    %22 = arith.cmpi slt, %3, %21 : vector<8x1xi32>
    %23 = vector.broadcast %22 : vector<8x1xi1> to vector<8x16xi1>
    %24 = vector.broadcast %20 : vector<1x16xi1> to vector<8x16xi1>
    %25 = arith.andi %23, %24 : vector<8x16xi1>
    %cst_3 = arith.constant -1.000000e+30 : f32
    %26 = vector.shape_cast %20 : vector<1x16xi1> to vector<1x16xi1>
    %27 = vector.broadcast %26 : vector<1x16xi1> to vector<8x16xi1>
    %28 = vector.broadcast %cst_3 : f32 to vector<8x16xf32>
    %29 = arith.select %27, %12, %28 : vector<8x16xi1>, vector<8x16xf32>
    %cst_4 = arith.constant dense<0xFF800000> : vector<8xf32>
    %30 = vector.multi_reduction <maximumf>, %29, %cst_4 [1] : vector<8x16xf32> to vector<8xf32>
    %31 = vector.shape_cast %30 : vector<8xf32> to vector<8x1xf32>
    %32 = vector.broadcast %31 : vector<8x1xf32> to vector<8x16xf32>
    %33 = arith.subf %29, %32 : vector<8x16xf32>
    %34 = vector.broadcast %18 : vector<8x1xf32> to vector<8x16xf32>
    %35 = arith.mulf %33, %34 : vector<8x16xf32>
    %36 = math.exp %35 : vector<8x16xf32>
    %cst_5 = arith.constant 0.000000e+00 : f32
    %37 = vector.broadcast %cst_5 : f32 to vector<8x16xf32>
    %38 = arith.select %25, %36, %37 : vector<8x16xi1>, vector<8x16xf32>
    %cst_6 = arith.constant dense<0.000000e+00> : vector<8xf32>
    %39 = vector.multi_reduction <add>, %38, %cst_6 [1] : vector<8x16xf32> to vector<8xf32>
    %40 = vector.shape_cast %39 : vector<8xf32> to vector<8x1xf32>
    %cst_7 = arith.constant 9.99999997E-7 : f32
    %41 = vector.broadcast %cst_7 : f32 to vector<8x1xf32>
    %42 = arith.maximumf %40, %41 : vector<8x1xf32>
    %43 = tpu.reciprocal %42 {approx = true} : vector<8x1xf32> -> vector<8x1xf32>
    %44 = vector.broadcast %43 : vector<8x1xf32> to vector<8x16xf32>
    %45 = arith.mulf %38, %44 : vector<8x16xf32>
    %c0_8 = arith.constant 0 : index
    %c0_9 = arith.constant 0 : index
    %c0_10 = arith.constant 0 : index
    %46 = vector.load %arg5[%c0_8, %c0_9, %c0_10] : memref<1x8x16xf32, #tpu.memory_space<vmem>>, vector<1x8x16xf32>
    %47 = vector.shape_cast %46 : vector<1x8x16xf32> to vector<8x16xf32>
    %48 = vector.shape_cast %45 : vector<8x16xf32> to vector<1x8x16xf32>
    tpu.vector_store %arg5[%c0_8, %c0_9, %c0_10], %48 {strides = array<i32>} : memref<1x8x16xf32, #tpu.memory_space<vmem>>, vector<1x8x16xf32>,
    return
  }
  func.func @transform_0(%arg0: i32, %arg1: i32, %arg2: memref<2xi32, #tpu.memory_space<smem>>, %arg3: memref<2xi32, #tpu.memory_space<smem>>) -> (i32, i32, i32) {
    %c0_i32 = arith.constant 0 : i32
    %c0_i32_0 = arith.constant 0 : i32
    return %arg0, %arg1, %c0_i32 : i32, i32, i32
  }
  func.func @transform_1(%arg0: i32, %arg1: i32, %arg2: memref<2xi32, #tpu.memory_space<smem>>, %arg3: memref<2xi32, #tpu.memory_space<smem>>) -> (i32, i32, i32) {
    %c0_i32 = arith.constant 0 : i32
    %c0_i32_0 = arith.constant 0 : i32
    return %arg0, %arg1, %c0_i32 : i32, i32, i32
  }
}

</mosaic_0001>

<llo_original>
// kernel: _fullpro_pallas.1
$region0: #{_fullpro_pallas.1}
  #allocation0 [shape = 'u32[]', space=smem, size = 0x4, offset = 0x4, fixed_abs, tag = 'smem constant byte address 0x4 - core index']
  #allocation1 [shape = 'u32[144,128]{1,0:T(1,128)}', space=vmem, size = 0x12000, scoped, tag = 'internal scratch']
  #allocation2 [shape = 's32[1]{0}', space=sflag, size = 0x4, scoped, tag = 'scoped memory for _fullpro_pallas.1']
  #allocation3 [shape = 'u8[512]{0}', space=smem, size = 0x200, scoped, tag = 'prefetched SMEM operand 0']
  #allocation4 [shape = 'u8[512]{0}', space=smem, size = 0x200, scoped, tag = 'prefetched SMEM operand 1']
  %s0 = inlined_call_operand.vmem [shape: s32[2], index: 0, kind: input, shape index: {}]
  %s1 = inlined_call_operand.vmem [shape: s32[2], index: 1, kind: input, shape index: {}]
  %s2 = inlined_call_operand.hbm [shape: f32[2,8,16], index: 2, kind: input, shape index: {}]
  %s3 = inlined_call_operand.hbm [shape: f32[2,8,16], index: 3, kind: output, shape index: {}]
  %s4 = sld [smem:[#allocation0]]
  $region41: #{_fullpro_pallas.1} parent=0
    _
  %s6 = ssub.s32 1, %s4
  %s7 = scalar_select 0, %s6, %s4
  %s8 = sshll.u32 %s0, 4
  %s9 = int_to_ptr.vmem [resolvable:$true] %s8
  %11 = dma.vmem_to_smem %s9, 16, [#allocation3], [#allocation2]
  %s12 = sshll.u32 %s1, 4
  %s13 = int_to_ptr.vmem [resolvable:$true] %s12
  %15 = dma.vmem_to_smem %s13, 16, [#allocation4], [#allocation2]
  %16 = dma.done [#allocation2], 32
  %17 = sfence
  $region1: #{_fullpro_pallas.1} parent=0
    #allocation5 [shape = 'u8[8192]{0}', space=vmem, size = 0x2000, scoped, tag = 'input window, operand 2']
    #allocation6 [shape = 's32[2]{0}', space=sflag, size = 0x8, scoped, tag = 'scoped memory for _fullpro_pallas.1']
    #allocation7 [shape = 's32[2]{0}', space=sflag, size = 0x8, scoped, tag = 'scoped memory for _fullpro_pallas.1']
    #allocation8 [shape = 'u8[8192]{0}', space=vmem, size = 0x2000, scoped, tag = 'output window, operand 0']
    %18 = vsyncpa [#allocation6], 0
    %s19 = scalar_lea.sflag [#allocation6], 1
    %20 = vsyncpa %s19, 0
    %21 = vsyncpa [#allocation7], 0
    %s22 = scalar_lea.sflag [#allocation7], 1
    %23 = vsyncpa %s22, 0
    loop: start=0, step=1, limit=4
    $region2: #{_fullpro_pallas.1} parent=1 // loop_pre_header
      _
    $region3: #{_fullpro_pallas.1} parent=1 // loop_header
      %s25 = sphi 0, %s29
      %p26 = scmp.ge.s32.totalorder %s25, 4
      %s32 = sphi 0, %s44
      %s33 = sphi 0, %s40
      %s34 = sphi 0, %s32
      %s35 = sphi 0, %s33
      %s36 = sphi 0, %s34
      %s37 = sphi 0, %s35
      %s49 = sphi 0, %s51
      %s52 = sphi 0, %s49
      %s53 = sphi 0, %s52
      %s69 = sphi 0, %s53
      %s77 = sphi 0, %s79
      %s80 = sphi 0, %s77
      %s81 = sphi 0, %s80
      %s97 = sphi 0, %s81
    $region4: #{_fullpro_pallas.1} parent=1 // loop_header_branch
      %28 = sbr.rel (%p26) target = $region8
    $region5: #{_fullpro_pallas.1} parent=1 // loop_body
      %s30 = ssub.s32 %s25, 1
      %s31 = ssub.s32 %s25, 2
      %s38 = sadd.s32 1, %s33
      %p39 = scmp.ge.s32.totalorder %s38, 1
      %s40 = scalar_select %p39, 0, %s38
      %s41 = sadd.s32 1, %s32
      %s42 = scalar_select %p39, %s41, %s32
      %p43 = scmp.ge.s32.totalorder %s42, 2
      %s44 = scalar_select %p43, 0, %s42
      %s45 = ssub.s32 %s32, %s44
      %s46 = ssub.s32 %s33, %s40
      %s47 = sor.u32 %s45, %s46
      %p48 = scmp.eq.s32.totalorder %s47, 0
      %s50 = sadd.s32 %s49, 1
      %s51 = scalar_select %p48, %s49, %s50
      %p54 = pneg %p48
      %p55 = scmp.eq.s32.totalorder %s25, 1
      %p56 = por %p54, %p55
      %p57 = scmp.ne.s32.totalorder %s49, %s52
      %p58 = scmp.eq.s32.totalorder %s25, 0
      %p59 = por %p57, %p58
      %p60 = scmp.ne.s32.totalorder %s49, %s52
      %p61 = scmp.eq.s32.totalorder %s30, 1
      %p62 = por %p60, %p61
      %p63 = scmp.ne.s32.totalorder %s52, %s53
      %p64 = scmp.eq.s32.totalorder %s30, 0
      %p65 = por %p63, %p64
      %p66 = scmp.ne.s32.totalorder %s52, %s53
      %p67 = scmp.eq.s32.totalorder %s31, 1
      %p68 = por %p66, %p67
      %p70 = scmp.ne.s32.totalorder %s53, %s69
      %p71 = scmp.eq.s32.totalorder %s31, 0
      %p72 = por %p70, %p71
      %s73 = ssub.s32 %s32, %s44
      %s74 = ssub.s32 %s33, %s40
      %s75 = sor.u32 %s73, %s74
      %p76 = scmp.eq.s32.totalorder %s75, 0
      %s78 = sadd.s32 %s77, 1
      %s79 = scalar_select %p76, %s77, %s78
      %p82 = pneg %p76
      %p83 = scmp.eq.s32.totalorder %s25, 1
      %p84 = por %p82, %p83
      %p85 = scmp.ne.s32.totalorder %s77, %s80
      %p86 = scmp.eq.s32.totalorder %s25, 0
      %p87 = por %p85, %p86
      %p88 = scmp.ne.s32.totalorder %s77, %s80
      %p89 = scmp.eq.s32.totalorder %s30, 1
      %p90 = por %p88, %p89
      %p91 = scmp.ne.s32.totalorder %s80, %s81
      %p92 = scmp.eq.s32.totalorder %s30, 0
      %p93 = por %p91, %p92
      %p94 = scmp.ne.s32.totalorder %s80, %s81
      %p95 = scmp.eq.s32.totalorder %s31, 1
      %p96 = por %p94, %p95
      %p98 = scmp.ne.s32.totalorder %s81, %s97
      %p99 = scmp.eq.s32.totalorder %s31, 0
      %p100 = por %p98, %p99
      %p101 = scmp.le.s32.totalorder 1, %s25
      %p102 = scmp.lt.s32.totalorder %s25, 3
      %p103 = pnand %p101, %p102
      %p104 = pneg %p103
      // Predicated region
      $region9: #{_fullpro_pallas.1} parent=5 // pred_check
        _
      $region10: #{_fullpro_pallas.1} parent=5 // pred_check_branch
        %106 = sbr.rel (%p103) target = $region12
      $region11: #{_fullpro_pallas.1} parent=5 // pred_region
        %s107 = ssub.s32 %s25, 1
      $region12: #{_fullpro_pallas.1} parent=5 // pred_fallthru
        _
      %p108 = scmp.lt.s32.totalorder %s25, 2
      // Predicated region
      $region13: #{_fullpro_pallas.1} parent=5 // pred_check
        %p109 = pneg %p108
      $region14: #{_fullpro_pallas.1} parent=5 // pred_check_branch
        %111 = sbr.rel (%p109) target = $region16
      $region15: #{_fullpro_pallas.1} parent=5 // pred_region
        // Predicated region
        $region17: #{_fullpro_pallas.1} parent=15 // pred_check
          %p112 = pneg %p59
        $region18: #{_fullpro_pallas.1} parent=15 // pred_check_branch
          %114 = sbr.rel (%p112) target = $region20
        $region19: #{_fullpro_pallas.1} parent=15 // pred_region
          %s115 = sand.u32 %s49, 1
          %s116 = scalar_lea.sflag [#allocation6], %s115
          %s117 = sand.u32 %s49, 1
          %s118 = smul.addr %s117, 8
          %s119 = scalar_lea.vmem [#allocation5], %s118
          %s121 = ssub.s32 128, 128
          %122 = vsyncadd %s116, %s121
          %s123 = sadd.s32 %s33, %s32
          %s124 = smul.addr %s123, 128
          %s125 = scalar_lea.hbm %s2, %s124
          %s127 = sshll.u32 %s119, 4
          %s128 = int_to_ptr.vmem [resolvable:$true] %s127
          %130 = dma.hbm_to_vmem [thread:$0]  %s125, 128, %s128, %s116
        $region20: #{_fullpro_pallas.1} parent=15 // pred_fallthru
          _
      $region16: #{_fullpro_pallas.1} parent=5 // pred_fallthru
        _
      %p131 = scmp.le.s32.totalorder 1, %s25
      %p132 = scmp.lt.s32.totalorder %s25, 3
      %p133 = pnand %p131, %p132
      %p134 = pneg %p133
      // Predicated region
      $region21: #{_fullpro_pallas.1} parent=5 // pred_check
        _
      $region22: #{_fullpro_pallas.1} parent=5 // pred_check_branch
        %136 = sbr.rel (%p133) target = $region24
      $region23: #{_fullpro_pallas.1} parent=5 // pred_region
        %s137 = ssub.s32 %s25, 1
        %s138 = sand.u32 %s52, 1
        %s139 = scalar_lea.sflag [#allocation6], %s138
        %s140 = sand.u32 %s52, 1
        %s141 = smul.addr %s140, 8
        %s142 = scalar_lea.vmem [#allocation5], %s141
        // Predicated region
        $region25: #{_fullpro_pallas.1} parent=23 // pred_check
          %p143 = pneg %p65
        $region26: #{_fullpro_pallas.1} parent=23 // pred_check_branch
          %145 = sbr.rel (%p143) target = $region28
        $region27: #{_fullpro_pallas.1} parent=23 // pred_region
          %146 = dma.done %s139, 128
        $region28: #{_fullpro_pallas.1} parent=23 // pred_fallthru
          _
        %s147 = sand.u32 %s52, 1
        %s148 = scalar_lea.sflag [#allocation6], %s147
        %s149 = sand.u32 %s52, 1
        %s150 = smul.addr %s149, 8
        %s151 = scalar_lea.vmem [#allocation5], %s150
        %p152 = pneg %p65
        %p153 = pneg %p62
        %p154 = pneg %p93
        %p155 = pneg %p90
        %s156 = sand.u32 %s80, 1
        %s157 = scalar_lea.sflag [#allocation7], %s156
        %s158 = sand.u32 %s80, 1
        %s159 = smul.addr %s158, 8
        %s160 = scalar_lea.vmem [#allocation8], %s159
        %s161 = smul.u32 %s35, 8
        %v162 = vlaneseq
        %v163 = vshrl.u32 %v162, 7
        %v164 = vstv %s161
        %v165 = vadd.s32 %v164, %v163
        %v166 = vlaneseq
        %v167 = vand.u32 %v166, 127
        %s168 = sld [smem:[#allocation3 + %s34]]
        %s169 = sld [smem:[#allocation4 + %s34]]
        %v170 = vld [vmem:[%s142] sm:$0xff]
        %v171 = vmul.f32 %v170, %v170
        %vm172 = vcmask 130048
        %v173 = vsel %vm172, %v171, 0.0
        %174 = vadd.xlane.f32.xlu0 %v173
        %v175 = vpop.xlane.xlu0 %174
        %v176 = vmax.f32 %v175, 1e-24
        %v177 = vrsqrt.pop %v176
        %v178 = vstv %s169
        %vm179 = vcmp.lt.s32.totalorder %v167, %v178
        %v180 = vstv %s168
        %vm181 = vcmp.lt.s32.totalorder %v165, %v180
        %v182 = vsel %vm181, 1, 0
        %vm183 = vcmp.eq.s32.totalorder %v182, 1
        %v184 = vsel %vm179, 1, 0
        %vm185 = vcmp.eq.s32.totalorder %v184, 1
        %vm186 = vmand %vm183, %vm185
        %v187 = vsel %vm185, %v170, -1e+30
        %v188 = vsel %vm172, %v187, -inf
        %189 = vmax.xlane.f32.xlu0 %v188
        %v190 = vpop.xlane.xlu0 %189
        %v191 = vsub.f32 %v187, %v190
        %v192 = vmul.f32 %v191, %v177
        %v193 = vmul.f32 %v192, 1.442695
        %v194 = vpow.pop %v193
        %v195 = vsel %vm186, %v194, 0.0
        %v196 = vsel %vm172, %v195, 0.0
        %197 = vadd.xlane.f32.xlu0 %v196
        %v198 = vpop.xlane.xlu0 %197
        %v199 = vmax.f32 %v198, 1e-06
        %v200 = vrcp.pop %v199
        %v201 = vmul.f32 %v195, %v200
        %202 = vst.msk [vmem:[%s160] sm:$0xff] %vm172, %v201
        %s203 = sand.u32 %s80, 1
        %s204 = scalar_lea.sflag [#allocation7], %s203
        %s205 = sand.u32 %s80, 1
        %s206 = smul.addr %s205, 8
        %s207 = scalar_lea.vmem [#allocation8], %s206
        // Predicated region
        $region29: #{_fullpro_pallas.1} parent=23 // pred_check
          %p208 = pneg %p90
        $region30: #{_fullpro_pallas.1} parent=23 // pred_check_branch
          %210 = sbr.rel (%p208) target = $region32
        $region31: #{_fullpro_pallas.1} parent=23 // pred_region
          %s212 = ssub.s32 128, 128
          %213 = vsyncadd %s204, %s212
          %s214 = sadd.s32 %s35, %s34
          %s215 = smul.addr %s214, 128
          %s216 = scalar_lea.hbm %s3, %s215
          %s218 = sshll.u32 %s207, 4
          %s219 = int_to_ptr.vmem [resolvable:$true] %s218
          %221 = dma.vmem_to_hbm [thread:$0]  %s219, 128, %s216, %s204
        $region32: #{_fullpro_pallas.1} parent=23 // pred_fallthru
          _
      $region24: #{_fullpro_pallas.1} parent=5 // pred_fallthru
        _
      %p222 = scmp.le.s32.totalorder 2, %s25
      // Predicated region
      $region33: #{_fullpro_pallas.1} parent=5 // pred_check
        %p223 = pneg %p222
      $region34: #{_fullpro_pallas.1} parent=5 // pred_check_branch
        %225 = sbr.rel (%p223) target = $region36
      $region35: #{_fullpro_pallas.1} parent=5 // pred_region
        %s226 = ssub.s32 %s25, 2
        // Predicated region
        $region37: #{_fullpro_pallas.1} parent=35 // pred_check
          %p227 = pneg %p96
        $region38: #{_fullpro_pallas.1} parent=35 // pred_check_branch
          %229 = sbr.rel (%p227) target = $region40
        $region39: #{_fullpro_pallas.1} parent=35 // pred_region
          %s230 = sand.u32 %s81, 1
          %s231 = scalar_lea.sflag [#allocation7], %s230
          %s232 = sand.u32 %s81, 1
          %s233 = smul.addr %s232, 8
          %s234 = scalar_lea.vmem [#allocation8], %s233
          %235 = dma.done %s231, 128
        $region40: #{_fullpro_pallas.1} parent=35 // pred_fallthru
          _
      $region36: #{_fullpro_pallas.1} parent=5 // pred_fallthru
        _
    $region6: #{_fullpro_pallas.1} parent=1 // loop_footer
      %s29 = sadd.s32 1, %s25
    $region7: #{_fullpro_pallas.1} parent=1 // loop_footer_branch
      %24 = sbr.rel target = $region3
    $region8: #{_fullpro_pallas.1} parent=1 // loop_exit
      _
    %236 = vsyncpa [#allocation6], 1
    %s237 = scalar_lea.sflag [#allocation6], 1
    %238 = vsyncpa %s237, 1
    %239 = vsyncpa [#allocation7], 1
    %s240 = scalar_lea.sflag [#allocation7], 1
    %241 = vsyncpa %s240, 1

</llo_original>
